<compile_context>
chip_gen: v7x
topology: tpu7x:2x2x1
jax: 0.10.0
libtpu: 0.0.40
codegen_flags: <defaults>
</compile_context>

<pallas_src>
import functools

import jax
import jax.numpy as jnp
import numpy as np
from jax.experimental import pallas as pl
from jax.experimental.pallas import tpu as pltpu

BN_EPS = 1e-5
_VMEM_LIMIT = 32 * 1024 * 1024


def _conv_tile(x_ref, w_ref, im_ref, *, K, V, T_out, stride):
    """Temporal (K x 1) conv on one lane-dense block.

    x_ref:  (C_in, T_pad*V) f32      -- one batch element, temporal axis flattened with V
    w_ref:  (C_tile, K*C_in) f32     -- tap-major weights
    im_ref: (K*C_in, T_out*V) f32    -- VMEM scratch holding the im2col matrix
    returns (C_tile, T_out*V) f32 from a single MXU dot (bf16 operands, f32 accumulate).
    """
    c_in = x_ref.shape[0]
    tov = T_out * V
    for k in range(K):  # static, unrolled at trace time
        if stride == 1:
            # contiguous lane-major window: rows k .. k+T_out-1 of the temporal axis
            xk = x_ref[:, k * V:k * V + tov]
        else:
            # TODO(synk): polyphase decomposition in the wrapper would keep stride>1 loads
            # unit-stride; this in-kernel reshape path is correct but slower.
            span = x_ref[:, k * V:k * V + T_out * stride * V]
            xk = span.reshape(c_in, T_out, stride, V)[:, :, 0, :].reshape(c_in, tov)
        im_ref[k * c_in:(k + 1) * c_in, :] = xk.astype(im_ref.dtype)
    w = w_ref[...].astype(jnp.bfloat16)
    return jnp.dot(w, im_ref[...].astype(jnp.bfloat16),
                   preferred_element_type=jnp.float32)


def _stats_kernel(x_ref, w_ref, ssum_ref, ssq_ref, im_ref, acc_sum, acc_sq,
                  *, K, V, T_out, stride):
    """Pass 1: per-channel sum / sum-of-squares of conv(x); conv output never leaves VMEM."""
    n = pl.program_id(1)

    @pl.when(n == 0)
    def _():
        acc_sum[...] = jnp.zeros_like(acc_sum)
        acc_sq[...] = jnp.zeros_like(acc_sq)

    y = _conv_tile(x_ref, w_ref, im_ref, K=K, V=V, T_out=T_out, stride=stride)
    acc_sum[...] += jnp.sum(y, axis=-1, keepdims=True)        # (C_tile, 1)
    acc_sq[...] += jnp.sum(y * y, axis=-1, keepdims=True)

    # write statistics to the output refs only once, on the last batch step
    @pl.when(n == pl.num_programs(1) - 1)
    def _():
        ssum_ref[...] = acc_sum[...]
        ssq_ref[...] = acc_sq[...]


def _conv_bn_kernel(x_ref, w_ref, scale_ref, shift_ref, o_ref, im_ref,
                    *, K, V, T_out, stride):
    """Pass 2: recompute conv, apply folded BatchNorm scale/shift, single dense write."""
    y = _conv_tile(x_ref, w_ref, im_ref, K=K, V=V, T_out=T_out, stride=stride)
    o_ref[...] = (y * scale_ref[...] + shift_ref[...]).astype(o_ref.dtype)


def tcn_forward(x, weight, bias, gamma, beta, *, kernel_size=9, stride=1):
    """x: (N, C_in, T, V) f32; weight: (C_out, C_in, K) f32 (PyTorch (C_out,C_in,K,1) squeezed)."""
    del bias  # cancels exactly under training-mode BatchNorm (see header comment)
    N, C_in, T, V = x.shape
    C_out = weight.shape[0]
    K = kernel_size
    pad = (K - 1) // 2
    extra = stride - 1 if stride > 1 else 0   # tail pad so stride>1 tap windows stay in-bounds
    T_pad = T + 2 * pad + extra
    T_out = (T + 2 * pad - K) // stride + 1
    TPV = T_pad * V
    TOV = T_out * V
    KC = K * C_in

    # lane-dense views: flatten (T, V) -> T*V so the last axis is a multiple of 128
    x_flat = jnp.pad(x, ((0, 0), (0, 0), (pad, pad + extra), (0, 0))).reshape(N, C_in, TPV)
    # weight (C_out, C_in, K) -> (C_out, K*C_in), tap-major to match the im2col row order
    w2 = jnp.transpose(weight, (0, 2, 1)).reshape(C_out, KC)

    # independent channel tiles (only when they stay (8,128)-tileable) -> v7x megacore split
    co_tiles = 2 if (C_out % 16 == 0) else 1
    CO = C_out // co_tiles

    conv_kw = dict(K=K, V=V, T_out=T_out, stride=stride)

    # ---- pass 1: per-channel conv statistics (no HBM write of the conv output) ----
    ssum, ssq = pl.pallas_call(
        functools.partial(_stats_kernel, **conv_kw),
        out_shape=(jax.ShapeDtypeStruct((C_out, 1), jnp.float32),
                   jax.ShapeDtypeStruct((C_out, 1), jnp.float32)),
        grid_spec=pltpu.PrefetchScalarGridSpec(
            num_scalar_prefetch=0,
            grid=(co_tiles, N),
            in_specs=[
                pl.BlockSpec((None, C_in, TPV), lambda c, n: (n, 0, 0)),
                pl.BlockSpec((CO, KC), lambda c, n: (c, 0)),
            ],
            out_specs=[
                pl.BlockSpec((CO, 1), lambda c, n: (c, 0)),
                pl.BlockSpec((CO, 1), lambda c, n: (c, 0)),
            ],
            scratch_shapes=[
                pltpu.VMEM((KC, TOV), jnp.float32),   # im2col buffer
                pltpu.VMEM((CO, 1), jnp.float32),     # ssum accumulator
                pltpu.VMEM((CO, 1), jnp.float32),     # ssq accumulator
            ],
        ),
        compiler_params=pltpu.CompilerParams(
            # N axis MUST stay "arbitrary": the stats accumulate sequentially across it.
            dimension_semantics=("parallel", "arbitrary"),
            vmem_limit_bytes=_VMEM_LIMIT),
    )(x_flat, w2)

    # ---- fold training-mode BatchNorm into per-channel scale/shift (tiny, done once) ----
    count = float(N * T_out * V)
    mean = ssum / count                                         # (C_out, 1)
    # E[y^2] - E[y]^2 in f32; fine at these scales (|mean| << std). For very large
    # N*T*V with large channel means, switch to a shifted/compensated accumulation.
    var = jnp.maximum(ssq / count - mean * mean, 0.0)
    scale = gamma.reshape(C_out, 1) * jax.lax.rsqrt(var + BN_EPS)
    shift = beta.reshape(C_out, 1) - mean * scale

    # ---- pass 2: recompute conv + apply folded BN, single lane-dense HBM write ----
    out_flat = pl.pallas_call(
        functools.partial(_conv_bn_kernel, **conv_kw),
        out_shape=jax.ShapeDtypeStruct((N, C_out, TOV), jnp.float32),
        grid_spec=pltpu.PrefetchScalarGridSpec(
            num_scalar_prefetch=0,
            grid=(N,),
            in_specs=[
                pl.BlockSpec((None, C_in, TPV), lambda n: (n, 0, 0)),
                pl.BlockSpec((C_out, KC), lambda n: (0, 0)),
                pl.BlockSpec((C_out, 1), lambda n: (0, 0)),
                pl.BlockSpec((C_out, 1), lambda n: (0, 0)),
            ],
            out_specs=pl.BlockSpec((None, C_out, TOV), lambda n: (n, 0, 0)),
            scratch_shapes=[pltpu.VMEM((KC, TOV), jnp.float32)],
        ),
        compiler_params=pltpu.CompilerParams(
            dimension_semantics=("parallel",),
            vmem_limit_bytes=_VMEM_LIMIT),
    )(x_flat, w2, scale, shift)

    return out_flat.reshape(N, C_out, T_out, V)


def _reference(x, weight, gamma, beta, *, kernel_size=9, stride=1):
    """Pure-JAX reference (Conv2d (K,1) + training-mode BatchNorm2d).

    Conv operands are rounded to bf16 with f32 accumulation to mirror the kernel's MXU
    numerics (per perf review); the bias is omitted since it cancels under training-mode BN.
    """
    pad = (kernel_size - 1) // 2
    w4 = weight[:, :, :, None].astype(jnp.bfloat16)             # (C_out, C_in, K, 1)
    y = jax.lax.conv_general_dilated(
        x.astype(jnp.bfloat16), w4,
        window_strides=(stride, 1), padding=((pad, pad), (0, 0)),
        dimension_numbers=('NCHW', 'OIHW', 'NCHW'),
        preferred_element_type=jnp.float32,
        precision=jax.lax.Precision.HIGHEST)
    mean = y.mean(axis=(0, 2, 3), keepdims=True)
    var = ((y - mean) ** 2).mean(axis=(0, 2, 3), keepdims=True)
    return (y - mean) * jax.lax.rsqrt(var + BN_EPS) * gamma[None, :, None, None] \
        + beta[None, :, None, None]


if __name__ == "__main__":
    # small shapes: N=2 sequences, C_in=4 -> C_out=8 channels, T=16 frames, V=16 joints
    N, C_in, C_out, T, V = 2, 4, 8, 16, 16
    K, stride = 9, 1

    key = jax.random.PRNGKey(0)
    kx, kw = jax.random.split(key)
    x = jax.random.normal(kx, (N, C_in, T, V), dtype=jnp.float32)

    # conv_init: kaiming_normal_(mode='fan_out') -> std = sqrt(2 / (C_out * K * 1)); bias = 0
    fan_out = C_out * K * 1
    weight = (jax.random.normal(kw, (C_out, C_in, K), dtype=jnp.float32)
              * np.sqrt(2.0 / fan_out)).astype(jnp.float32)
    bias = jnp.zeros((C_out,), jnp.float32)
    # bn_init(bn, 1): gamma = 1, beta = 0
    gamma = jnp.ones((C_out,), jnp.float32)
    beta = jnp.zeros((C_out,), jnp.float32)

    out = tcn_forward(x, weight, bias, gamma, beta, kernel_size=K, stride=stride)
    out = jax.block_until_ready(out)
    assert out.shape == (N, C_out, T, V)

    ref = _reference(x, weight, gamma, beta, kernel_size=K, stride=stride)
    # bf16 MXU operands on both sides -> only f32 accumulation-order differences remain
    np.testing.assert_allclose(np.asarray(out), np.asarray(ref), atol=2e-4, rtol=2e-4)

    print("KERNEL_OK")
</pallas_src>

<mosaic_0001>
module attributes {stable_mosaic.version = 11 : i64} {
  func.func @_stats_kernel(%arg0: i32, %arg1: i32, %arg2: memref<1x4x384xf32, #tpu.memory_space<vmem>>, %arg3: memref<8x36xf32, #tpu.memory_space<vmem>>, %arg4: memref<8x1xf32, #tpu.memory_space<vmem>>, %arg5: memref<8x1xf32, #tpu.memory_space<vmem>>, %arg6: memref<36x256xf32, #tpu.memory_space<vmem>>, %arg7: memref<8x1xf32, #tpu.memory_space<vmem>>, %arg8: memref<8x1xf32, #tpu.memory_space<vmem>>) attributes {dimension_semantics = [#tpu.dimension_semantics<parallel>, #tpu.dimension_semantics<arbitrary>], iteration_bounds = array<i64: 1, 2>, scalar_prefetch = 0 : i64, scratch_operands = 3 : i64, tpu.core_type = #tpu.core_type<tc>, window_params = [{transform_indices = @transform_0, window_bounds = array<i64: 1, 4, 384>}, {transform_indices = @transform_1, window_bounds = array<i64: 8, 36>}, {transform_indices = @transform_2, window_bounds = array<i64: 8, 1>}, {transform_indices = @transform_3, window_bounds = array<i64: 8, 1>}]} {
    %c0_i32 = arith.constant 0 : i32
    %0 = arith.cmpi eq, %arg1, %c0_i32 : i32
    %1 = arith.extui %0 : i1 to i32
    %c0_i32_0 = arith.constant 0 : i32
    %2 = arith.cmpi ne, %1, %c0_i32_0 : i32
    scf.if %2 {
      %cst_46 = arith.constant 0.000000e+00 : f32
      %49 = vector.broadcast %cst_46 : f32 to vector<8x1xf32>
      %c0_47 = arith.constant 0 : index
      %c0_48 = arith.constant 0 : index
      %50 = vector.load %arg7[%c0_47, %c0_48] : memref<8x1xf32, #tpu.memory_space<vmem>>, vector<8x1xf32>
      tpu.vector_store %arg7[%c0_47, %c0_48], %49 {strides = array<i32>} : memref<8x1xf32, #tpu.memory_space<vmem>>, vector<8x1xf32>,
      %cst_49 = arith.constant 0.000000e+00 : f32
      %51 = vector.broadcast %cst_49 : f32 to vector<8x1xf32>
      %c0_50 = arith.constant 0 : index
      %c0_51 = arith.constant 0 : index
      %52 = vector.load %arg8[%c0_50, %c0_51] : memref<8x1xf32, #tpu.memory_space<vmem>>, vector<8x1xf32>
      tpu.vector_store %arg8[%c0_50, %c0_51], %51 {strides = array<i32>} : memref<8x1xf32, #tpu.memory_space<vmem>>, vector<8x1xf32>,
    } else {
    }
    %c0 = arith.constant 0 : index
    %c0_1 = arith.constant 0 : index
    %c0_2 = arith.constant 0 : index
    %3 = vector.load %arg2[%c0, %c0_1, %c0_2] : memref<1x4x384xf32, #tpu.memory_space<vmem>>, vector<1x4x256xf32>
    %4 = vector.shape_cast %3 : vector<1x4x256xf32> to vector<4x256xf32>
    %c0_3 = arith.constant 0 : index
    %c0_4 = arith.constant 0 : index
    %5 = vector.load %arg6[%c0_3, %c0_4] : memref<36x256xf32, #tpu.memory_space<vmem>>, vector<4x256xf32>
    tpu.vector_store %arg6[%c0_3, %c0_4], %4 {strides = array<i32>} : memref<36x256xf32, #tpu.memory_space<vmem>>, vector<4x256xf32>,
    %c0_5 = arith.constant 0 : index
    %c0_6 = arith.constant 0 : index
    %c16 = arith.constant 16 : index
    %6 = vector.load %arg2[%c0_5, %c0_6, %c16] : memref<1x4x384xf32, #tpu.memory_space<vmem>>, vector<1x4x256xf32>
    %7 = vector.shape_cast %6 : vector<1x4x256xf32> to vector<4x256xf32>
    %c4 = arith.constant 4 : index
    %c0_7 = arith.constant 0 : index
    %8 = vector.load %arg6[%c4, %c0_7] : memref<36x256xf32, #tpu.memory_space<vmem>>, vector<4x256xf32>
    tpu.vector_store %arg6[%c4, %c0_7], %7 {strides = array<i32>} : memref<36x256xf32, #tpu.memory_space<vmem>>, vector<4x256xf32>,
    %c0_8 = arith.constant 0 : index
    %c0_9 = arith.constant 0 : index
    %c32 = arith.constant 32 : index
    %9 = vector.load %arg2[%c0_8, %c0_9, %c32] : memref<1x4x384xf32, #tpu.memory_space<vmem>>, vector<1x4x256xf32>
    %10 = vector.shape_cast %9 : vector<1x4x256xf32> to vector<4x256xf32>
    %c8 = arith.constant 8 : index
    %c0_10 = arith.constant 0 : index
    %11 = vector.load %arg6[%c8, %c0_10] : memref<36x256xf32, #tpu.memory_space<vmem>>, vector<4x256xf32>
    tpu.vector_store %arg6[%c8, %c0_10], %10 {strides = array<i32>} : memref<36x256xf32, #tpu.memory_space<vmem>>, vector<4x256xf32>,
    %c0_11 = arith.constant 0 : index
    %c0_12 = arith.constant 0 : index
    %c48 = arith.constant 48 : index
    %12 = vector.load %arg2[%c0_11, %c0_12, %c48] : memref<1x4x384xf32, #tpu.memory_space<vmem>>, vector<1x4x256xf32>
    %13 = vector.shape_cast %12 : vector<1x4x256xf32> to vector<4x256xf32>
    %c12 = arith.constant 12 : index
    %c0_13 = arith.constant 0 : index
    %14 = vector.load %arg6[%c12, %c0_13] : memref<36x256xf32, #tpu.memory_space<vmem>>, vector<4x256xf32>
    tpu.vector_store %arg6[%c12, %c0_13], %13 {strides = array<i32>} : memref<36x256xf32, #tpu.memory_space<vmem>>, vector<4x256xf32>,
    %c0_14 = arith.constant 0 : index
    %c0_15 = arith.constant 0 : index
    %c64 = arith.constant 64 : index
    %15 = vector.load %arg2[%c0_14, %c0_15, %c64] : memref<1x4x384xf32, #tpu.memory_space<vmem>>, vector<1x4x256xf32>
    %16 = vector.shape_cast %15 : vector<1x4x256xf32> to vector<4x256xf32>
    %c16_16 = arith.constant 16 : index
    %c0_17 = arith.constant 0 : index
    %17 = vector.load %arg6[%c16_16, %c0_17] : memref<36x256xf32, #tpu.memory_space<vmem>>, vector<4x256xf32>
    tpu.vector_store %arg6[%c16_16, %c0_17], %16 {strides = array<i32>} : memref<36x256xf32, #tpu.memory_space<vmem>>, vector<4x256xf32>,
    %c0_18 = arith.constant 0 : index
    %c0_19 = arith.constant 0 : index
    %c80 = arith.constant 80 : index
    %18 = vector.load %arg2[%c0_18, %c0_19, %c80] : memref<1x4x384xf32, #tpu.memory_space<vmem>>, vector<1x4x256xf32>
    %19 = vector.shape_cast %18 : vector<1x4x256xf32> to vector<4x256xf32>
    %c20 = arith.constant 20 : index
    %c0_20 = arith.constant 0 : index
    %20 = vector.load %arg6[%c20, %c0_20] : memref<36x256xf32, #tpu.memory_space<vmem>>, vector<4x256xf32>
    tpu.vector_store %arg6[%c20, %c0_20], %19 {strides = array<i32>} : memref<36x256xf32, #tpu.memory_space<vmem>>, vector<4x256xf32>,
    %c0_21 = arith.constant 0 : index
    %c0_22 = arith.constant 0 : index
    %c96 = arith.constant 96 : index
    %21 = vector.load %arg2[%c0_21, %c0_22, %c96] : memref<1x4x384xf32, #tpu.memory_space<vmem>>, vector<1x4x256xf32>
    %22 = vector.shape_cast %21 : vector<1x4x256xf32> to vector<4x256xf32>
    %c24 = arith.constant 24 : index
    %c0_23 = arith.constant 0 : index
    %23 = vector.load %arg6[%c24, %c0_23] : memref<36x256xf32, #tpu.memory_space<vmem>>, vector<4x256xf32>
    tpu.vector_store %arg6[%c24, %c0_23], %22 {strides = array<i32>} : memref<36x256xf32, #tpu.memory_space<vmem>>, vector<4x256xf32>,
    %c0_24 = arith.constant 0 : index
    %c0_25 = arith.constant 0 : index
    %c112 = arith.constant 112 : index
    %24 = vector.load %arg2[%c0_24, %c0_25, %c112] : memref<1x4x384xf32, #tpu.memory_space<vmem>>, vector<1x4x256xf32>
    %25 = vector.shape_cast %24 : vector<1x4x256xf32> to vector<4x256xf32>
    %c28 = arith.constant 28 : index
    %c0_26 = arith.constant 0 : index
    %26 = vector.load %arg6[%c28, %c0_26] : memref<36x256xf32, #tpu.memory_space<vmem>>, vector<4x256xf32>
    tpu.vector_store %arg6[%c28, %c0_26], %25 {strides = array<i32>} : memref<36x256xf32, #tpu.memory_space<vmem>>, vector<4x256xf32>,
    %c0_27 = arith.constant 0 : index
    %c0_28 = arith.constant 0 : index
    %c128 = arith.constant 128 : index
    %27 = vector.load %arg2[%c0_27, %c0_28, %c128] : memref<1x4x384xf32, #tpu.memory_space<vmem>>, vector<1x4x256xf32>
    %28 = vector.shape_cast %27 : vector<1x4x256xf32> to vector<4x256xf32>
    %c32_29 = arith.constant 32 : index
    %c0_30 = arith.constant 0 : index
    %29 = vector.load %arg6[%c32_29, %c0_30] : memref<36x256xf32, #tpu.memory_space<vmem>>, vector<4x256xf32>
    tpu.vector_store %arg6[%c32_29, %c0_30], %28 {strides = array<i32>} : memref<36x256xf32, #tpu.memory_space<vmem>>, vector<4x256xf32>,
    %c0_31 = arith.constant 0 : index
    %c0_32 = arith.constant 0 : index
    %30 = vector.load %arg3[%c0_31, %c0_32] : memref<8x36xf32, #tpu.memory_space<vmem>>, vector<8x36xf32>
    %31 = arith.truncf %30 : vector<8x36xf32> to vector<8x36xbf16>
    %c0_33 = arith.constant 0 : index
    %c0_34 = arith.constant 0 : index
    %32 = vector.load %arg6[%c0_33, %c0_34] : memref<36x256xf32, #tpu.memory_space<vmem>>, vector<36x256xf32>
    %33 = arith.truncf %32 : vector<36x256xf32> to vector<36x256xbf16>
    %cst = arith.constant dense<0.000000e+00> : vector<8x256xf32>
    %34 = tpu.matmul %31, %33, %cst {dimension_numbers = #tpu.dot_dimension_numbers<[1], [0], [0], [1], [0, 0, 1, 1], [], []>} : vector<8x36xbf16>, vector<36x256xbf16>, vector<8x256xf32> -> vector<8x256xf32>
    %c0_35 = arith.constant 0 : index
    %c0_36 = arith.constant 0 : index
    %35 = vector.load %arg7[%c0_35, %c0_36] : memref<8x1xf32, #tpu.memory_space<vmem>>, vector<8x1xf32>
    %cst_37 = arith.constant dense<0.000000e+00> : vector<8xf32>
    %36 = vector.multi_reduction <add>, %34, %cst_37 [1] : vector<8x256xf32> to vector<8xf32>
    %37 = vector.shape_cast %36 : vector<8xf32> to vector<8x1xf32>
    %38 = arith.addf %35, %37 : vector<8x1xf32>
    %c0_38 = arith.constant 0 : index
    %c0_39 = arith.constant 0 : index
    %39 = vector.load %arg7[%c0_38, %c0_39] : memref<8x1xf32, #tpu.memory_space<vmem>>, vector<8x1xf32>
    tpu.vector_store %arg7[%c0_38, %c0_39], %38 {strides = array<i32>} : memref<8x1xf32, #tpu.memory_space<vmem>>, vector<8x1xf32>,
    %c0_40 = arith.constant 0 : index
    %c0_41 = arith.constant 0 : index
    %40 = vector.load %arg8[%c0_40, %c0_41] : memref<8x1xf32, #tpu.memory_space<vmem>>, vector<8x1xf32>
    %41 = arith.mulf %34, %34 : vector<8x256xf32>
    %cst_42 = arith.constant dense<0.000000e+00> : vector<8xf32>
    %42 = vector.multi_reduction <add>, %41, %cst_42 [1] : vector<8x256xf32> to vector<8xf32>
    %43 = vector.shape_cast %42 : vector<8xf32> to vector<8x1xf32>
    %44 = arith.addf %40, %43 : vector<8x1xf32>
    %c0_43 = arith.constant 0 : index
    %c0_44 = arith.constant 0 : index
    %45 = vector.load %arg8[%c0_43, %c0_44] : memref<8x1xf32, #tpu.memory_space<vmem>>, vector<8x1xf32>
    tpu.vector_store %arg8[%c0_43, %c0_44], %44 {strides = array<i32>} : memref<8x1xf32, #tpu.memory_space<vmem>>, vector<8x1xf32>,
    %c1_i32 = arith.constant 1 : i32
    %46 = arith.cmpi eq, %arg1, %c1_i32 : i32
    %47 = arith.extui %46 : i1 to i32
    %c0_i32_45 = arith.constant 0 : i32
    %48 = arith.cmpi ne, %47, %c0_i32_45 : i32
    scf.if %48 {
      %c0_46 = arith.constant 0 : index
      %c0_47 = arith.constant 0 : index
      %49 = vector.load %arg7[%c0_46, %c0_47] : memref<8x1xf32, #tpu.memory_space<vmem>>, vector<8x1xf32>
      %c0_48 = arith.constant 0 : index
      %c0_49 = arith.constant 0 : index
      %50 = vector.load %arg4[%c0_48, %c0_49] : memref<8x1xf32, #tpu.memory_space<vmem>>, vector<8x1xf32>
      tpu.vector_store %arg4[%c0_48, %c0_49], %49 {strides = array<i32>} : memref<8x1xf32, #tpu.memory_space<vmem>>, vector<8x1xf32>,
      %c0_50 = arith.constant 0 : index
      %c0_51 = arith.constant 0 : index
      %51 = vector.load %arg8[%c0_50, %c0_51] : memref<8x1xf32, #tpu.memory_space<vmem>>, vector<8x1xf32>
      %c0_52 = arith.constant 0 : index
      %c0_53 = arith.constant 0 : index
      %52 = vector.load %arg5[%c0_52, %c0_53] : memref<8x1xf32, #tpu.memory_space<vmem>>, vector<8x1xf32>
      tpu.vector_store %arg5[%c0_52, %c0_53], %51 {strides = array<i32>} : memref<8x1xf32, #tpu.memory_space<vmem>>, vector<8x1xf32>,
    } else {
    }
    return
  }
  func.func @transform_0(%arg0: i32, %arg1: i32) -> (i32, i32, i32) {
    %c0_i32 = arith.constant 0 : i32
    %c0_i32_0 = arith.constant 0 : i32
    %c0_i32_1 = arith.constant 0 : i32
    return %arg1, %c0_i32, %c0_i32_0 : i32, i32, i32
  }
  func.func @transform_1(%arg0: i32, %arg1: i32) -> (i32, i32) {
    %c0_i32 = arith.constant 0 : i32
    %c0_i32_0 = arith.constant 0 : i32
    return %arg0, %c0_i32 : i32, i32
  }
  func.func @transform_2(%arg0: i32, %arg1: i32) -> (i32, i32) {
    %c0_i32 = arith.constant 0 : i32
    %c0_i32_0 = arith.constant 0 : i32
    return %arg0, %c0_i32 : i32, i32
  }
  func.func @transform_3(%arg0: i32, %arg1: i32) -> (i32, i32) {
    %c0_i32 = arith.constant 0 : i32
    %c0_i32_0 = arith.constant 0 : i32
    return %arg0, %c0_i32 : i32, i32
  }
}

</mosaic_0001>

<llo_original>
// kernel: tpu_custom_call.1
$region0: #{tpu_custom_call.1}
  #allocation0 [shape = 'u32[]', space=smem, size = 0x4, offset = 0x4, fixed_abs, tag = 'smem constant byte address 0x4 - core index']
  #allocation1 [shape = 'u32[144,128]{1,0:T(1,128)}', space=vmem, size = 0x12000, scoped, tag = 'internal scratch']
  #allocation2 [shape = 'f32[36,256]{1,0:T(8,128)}', space=vmem, size = 0xa000, scoped, tag = 'scratch operand']
  #allocation3 [shape = 'f32[8,1]{1,0:T(8,128)}', space=vmem, size = 0x1000, scoped, tag = 'scratch operand']
  #allocation4 [shape = 'f32[8,1]{1,0:T(8,128)}', space=vmem, size = 0x1000, scoped, tag = 'scratch operand']
  %s0 = inlined_call_operand.hbm [shape: f32[2,4,384], index: 0, kind: input, shape index: {}]
  %s1 = inlined_call_operand.hbm [shape: f32[8,36], index: 1, kind: input, shape index: {}]
  %s2 = inlined_call_operand.vmem [shape: f32[8,1], index: 2, kind: output, shape index: {0}]
  %s3 = inlined_call_operand.vmem [shape: f32[8,1], index: 3, kind: output, shape index: {1}]
  %4 = xla_tuple %s2, %s3
  %s5 = sld [smem:[#allocation0]]
  $region65: #{tpu_custom_call.1} parent=0
    _
  %s7 = ssub.s32 1, %s5
  %s8 = scalar_select 0, %s7, %s5
  $region1: #{tpu_custom_call.1} parent=0
    #allocation5 [shape = 'u8[12288]{0}', space=vmem, size = 0x3000, scoped, tag = 'input window, operand 0']
    #allocation6 [shape = 's32[2]{0}', space=sflag, size = 0x8, scoped, tag = 'scoped memory for tpu_custom_call.1']
    #allocation7 [shape = 'u8[4096]{0}', space=vmem, size = 0x1000, scoped, tag = 'input window, operand 1, single buffered']
    #allocation8 [shape = 's32[1]{0}', space=sflag, size = 0x4, scoped, tag = 'scoped memory for tpu_custom_call.1']
    %9 = vsyncpa [#allocation6], 0
    %s10 = scalar_lea.sflag [#allocation6], 1
    %11 = vsyncpa %s10, 0
    %12 = vsyncpa [#allocation8], 0
    loop: start=0, step=1, limit=4
    $region2: #{tpu_custom_call.1} parent=1 // loop_pre_header
      _
    $region3: #{tpu_custom_call.1} parent=1 // loop_header
      %s14 = sphi 0, %s18
      %p15 = scmp.ge.s32.totalorder %s14, 4
      %s21 = sphi 0, %s33
      %s22 = sphi 0, %s29
      %s23 = sphi 0, %s21
      %s24 = sphi 0, %s22
      %s25 = sphi 0, %s23
      %s26 = sphi 0, %s24
      %s36 = sphi 0, %s38
      %s39 = sphi 0, %s36
      %s40 = sphi 0, %s39
      %s56 = sphi 0, %s40
      %s62 = sphi 0, %s64
      %s65 = sphi 0, %s62
      %s66 = sphi 0, %s65
      %s82 = sphi 0, %s66
      %s88 = sphi 0, %s90
      %s91 = sphi 0, %s88
      %s92 = sphi 0, %s91
      %s108 = sphi 0, %s92
      %s114 = sphi 0, %s116
      %s117 = sphi 0, %s114
      %s118 = sphi 0, %s117
      %s134 = sphi 0, %s118
    $region4: #{tpu_custom_call.1} parent=1 // loop_header_branch
      %17 = sbr.rel (%p15) target = $region8
    $region5: #{tpu_custom_call.1} parent=1 // loop_body
      %s19 = ssub.s32 %s14, 1
      %s20 = ssub.s32 %s14, 2
      %s27 = sadd.s32 1, %s22
      %p28 = scmp.ge.s32.totalorder %s27, 2
      %s29 = scalar_select %p28, 0, %s27
      %s30 = sadd.s32 1, %s21
      %s31 = scalar_select %p28, %s30, %s21
      %p32 = scmp.ge.s32.totalorder %s31, 1
      %s33 = scalar_select %p32, 0, %s31
      %s34 = ssub.s32 %s22, %s29
      %p35 = scmp.eq.s32.totalorder %s34, 0
      %s37 = sadd.s32 %s36, 1
      %s38 = scalar_select %p35, %s36, %s37
      %p41 = pneg %p35
      %p42 = scmp.eq.s32.totalorder %s14, 1
      %p43 = por %p41, %p42
      %p44 = scmp.ne.s32.totalorder %s36, %s39
      %p45 = scmp.eq.s32.totalorder %s14, 0
      %p46 = por %p44, %p45
      %p47 = scmp.ne.s32.totalorder %s36, %s39
      %p48 = scmp.eq.s32.totalorder %s19, 1
      %p49 = por %p47, %p48
      %p50 = scmp.ne.s32.totalorder %s39, %s40
      %p51 = scmp.eq.s32.totalorder %s19, 0
      %p52 = por %p50, %p51
      %p53 = scmp.ne.s32.totalorder %s39, %s40
      %p54 = scmp.eq.s32.totalorder %s20, 1
      %p55 = por %p53, %p54
      %p57 = scmp.ne.s32.totalorder %s40, %s56
      %p58 = scmp.eq.s32.totalorder %s20, 0
      %p59 = por %p57, %p58
      %s60 = ssub.s32 %s21, %s33
      %p61 = scmp.eq.s32.totalorder %s60, 0
      %s63 = sadd.s32 %s62, 1
      %s64 = scalar_select %p61, %s62, %s63
      %p67 = pneg %p61
      %p68 = scmp.eq.s32.totalorder %s14, 1
      %p69 = por %p67, %p68
      %p70 = scmp.ne.s32.totalorder %s62, %s65
      %p71 = scmp.eq.s32.totalorder %s14, 0
      %p72 = por %p70, %p71
      %p73 = scmp.ne.s32.totalorder %s62, %s65
      %p74 = scmp.eq.s32.totalorder %s19, 1
      %p75 = por %p73, %p74
      %p76 = scmp.ne.s32.totalorder %s65, %s66
      %p77 = scmp.eq.s32.totalorder %s19, 0
      %p78 = por %p76, %p77
      %p79 = scmp.ne.s32.totalorder %s65, %s66
      %p80 = scmp.eq.s32.totalorder %s20, 1
      %p81 = por %p79, %p80
      %p83 = scmp.ne.s32.totalorder %s66, %s82
      %p84 = scmp.eq.s32.totalorder %s20, 0
      %p85 = por %p83, %p84
      %s86 = ssub.s32 %s21, %s33
      %p87 = scmp.eq.s32.totalorder %s86, 0
      %s89 = sadd.s32 %s88, 1
      %s90 = scalar_select %p87, %s88, %s89
      %p93 = pneg %p87
      %p94 = scmp.eq.s32.totalorder %s14, 1
      %p95 = por %p93, %p94
      %p96 = scmp.ne.s32.totalorder %s88, %s91
      %p97 = scmp.eq.s32.totalorder %s14, 0
      %p98 = por %p96, %p97
      %p99 = scmp.ne.s32.totalorder %s88, %s91
      %p100 = scmp.eq.s32.totalorder %s19, 1
      %p101 = por %p99, %p100
      %p102 = scmp.ne.s32.totalorder %s91, %s92
      %p103 = scmp.eq.s32.totalorder %s19, 0
      %p104 = por %p102, %p103
      %p105 = scmp.ne.s32.totalorder %s91, %s92
      %p106 = scmp.eq.s32.totalorder %s20, 1
      %p107 = por %p105, %p106
      %p109 = scmp.ne.s32.totalorder %s92, %s108
      %p110 = scmp.eq.s32.totalorder %s20, 0
      %p111 = por %p109, %p110
      %s112 = ssub.s32 %s21, %s33
      %p113 = scmp.eq.s32.totalorder %s112, 0
      %s115 = sadd.s32 %s114, 1
      %s116 = scalar_select %p113, %s114, %s115
      %p119 = pneg %p113
      %p120 = scmp.eq.s32.totalorder %s14, 1
      %p121 = por %p119, %p120
      %p122 = scmp.ne.s32.totalorder %s114, %s117
      %p123 = scmp.eq.s32.totalorder %s14, 0
      %p124 = por %p122, %p123
      %p125 = scmp.ne.s32.totalorder %s114, %s117
      %p126 = scmp.eq.s32.totalorder %s19, 1
      %p127 = por %p125, %p126
      %p128 = scmp.ne.s32.totalorder %s117, %s118
      %p129 = scmp.eq.s32.totalorder %s19, 0
      %p130 = por %p128, %p129
      %p131 = scmp.ne.s32.totalorder %s117, %s118
      %p132 = scmp.eq.s32.totalorder %s20, 1
      %p133 = por %p131, %p132
      %p135 = scmp.ne.s32.totalorder %s118, %s134
      %p136 = scmp.eq.s32.totalorder %s20, 0
      %p137 = por %p135, %p136
      %p138 = scmp.le.s32.totalorder 1, %s14
      %p139 = scmp.lt.s32.totalorder %s14, 3
      %p140 = pnand %p138, %p139
      %p141 = pneg %p140
      // Predicated region
      $region9: #{tpu_custom_call.1} parent=5 // pred_check
        _
      $region10: #{tpu_custom_call.1} parent=5 // pred_check_branch
        %143 = sbr.rel (%p140) target = $region12
      $region11: #{tpu_custom_call.1} parent=5 // pred_region
        %s144 = ssub.s32 %s14, 1
        // Predicated region
        $region13: #{tpu_custom_call.1} parent=11 // pred_check
          %p145 = pneg %p78
        $region14: #{tpu_custom_call.1} parent=11 // pred_check_branch
          %147 = sbr.rel (%p145) target = $region16
        $region15: #{tpu_custom_call.1} parent=11 // pred_region
          %s149 = ssub.s32 128, 128
          %150 = vsyncadd [#allocation8], %s149
          %s151 = smul.addr %s23, 128
          %s152 = scalar_lea.hbm %s1, %s151
          %s154 = sshll.u32 [#allocation7], 4
          %s155 = int_to_ptr.vmem [resolvable:$true] %s154
          %157 = dma.hbm_to_vmem [thread:$0]  %s152, 128, %s155, [#allocation8]
        $region16: #{tpu_custom_call.1} parent=11 // pred_fallthru
          _
      $region12: #{tpu_custom_call.1} parent=5 // pred_fallthru
        _
      %p158 = scmp.lt.s32.totalorder %s14, 2
      // Predicated region
      $region17: #{tpu_custom_call.1} parent=5 // pred_check
        %p159 = pneg %p158
      $region18: #{tpu_custom_call.1} parent=5 // pred_check_branch
        %161 = sbr.rel (%p159) target = $region20
      $region19: #{tpu_custom_call.1} parent=5 // pred_region
        // Predicated region
        $region21: #{tpu_custom_call.1} parent=19 // pred_check
          %p162 = pneg %p46
        $region22: #{tpu_custom_call.1} parent=19 // pred_check_branch
          %164 = sbr.rel (%p162) target = $region24
        $region23: #{tpu_custom_call.1} parent=19 // pred_region
          %s165 = sand.u32 %s36, 1
          %s166 = scalar_lea.sflag [#allocation6], %s165
          %s167 = sand.u32 %s36, 1
          %s168 = smul.addr %s167, 12
          %s169 = scalar_lea.vmem [#allocation5], %s168
          %s171 = ssub.s32 192, 192
          %172 = vsyncadd %s166, %s171
          %s173 = smul.addr %s22, 3
          %s174 = smul.addr %s173, 64
          %s175 = scalar_lea.hbm %s0, %s174
          %s177 = sshll.u32 %s169, 4
          %s178 = int_to_ptr.vmem [resolvable:$true] %s177
          %180 = dma.hbm_to_vmem [thread:$0]  %s175, 192, %s178, %s166
        $region24: #{tpu_custom_call.1} parent=19 // pred_fallthru
          _
      $region20: #{tpu_custom_call.1} parent=5 // pred_fallthru
        _
      %p181 = scmp.le.s32.totalorder 1, %s14
      %p182 = scmp.lt.s32.totalorder %s14, 3
      %p183 = pnand %p181, %p182
      %p184 = pneg %p183
      // Predicated region
      $region25: #{tpu_custom_call.1} parent=5 // pred_check
        _
      $region26: #{tpu_custom_call.1} parent=5 // pred_check_branch
        %186 = sbr.rel (%p183) target = $region28
      $region27: #{tpu_custom_call.1} parent=5 // pred_region
        %s187 = ssub.s32 %s14, 1
        %s188 = sand.u32 %s39, 1
        %s189 = scalar_lea.sflag [#allocation6], %s188
        %s190 = sand.u32 %s39, 1
        %s191 = smul.addr %s190, 12
        %s192 = scalar_lea.vmem [#allocation5], %s191
        // Predicated region
        $region29: #{tpu_custom_call.1} parent=27 // pred_check
          %p193 = pneg %p52
        $region30: #{tpu_custom_call.1} parent=27 // pred_check_branch
          %195 = sbr.rel (%p193) target = $region32
        $region31: #{tpu_custom_call.1} parent=27 // pred_region
          %196 = dma.done %s189, 192
        $region32: #{tpu_custom_call.1} parent=27 // pred_fallthru
          _
        // Predicated region
        $region33: #{tpu_custom_call.1} parent=27 // pred_check
          %p197 = pneg %p78
        $region34: #{tpu_custom_call.1} parent=27 // pred_check_branch
          %199 = sbr.rel (%p197) target = $region36
        $region35: #{tpu_custom_call.1} parent=27 // pred_region
          %200 = dma.done [#allocation8], 128
        $region36: #{tpu_custom_call.1} parent=27 // pred_fallthru
          _
        %s201 = sand.u32 %s39, 1
        %s202 = scalar_lea.sflag [#allocation6], %s201
        %s203 = sand.u32 %s39, 1
        %s204 = smul.addr %s203, 12
        %s205 = scalar_lea.vmem [#allocation5], %s204
        %p206 = pneg %p52
        %p207 = pneg %p49
        %p208 = pneg %p78
        %p209 = pneg %p75
        %p210 = pneg %p104
        %p211 = pneg %p101
        %p212 = scmp.lt.s32.totalorder %s23, 0
        %s213 = scalar_select %p212, %s23, 0
        %s214 = smul.addr %s213, 8
        %s215 = scalar_lea.vmem %s2, %s214
        %p216 = pneg %p130
        %p217 = pneg %p127
        %p218 = scmp.lt.s32.totalorder %s23, 0
        %s219 = scalar_select %p218, %s23, 0
        %s220 = smul.addr %s219, 8
        %s221 = scalar_lea.vmem %s3, %s220
        %p222 = scmp.lt.s32.totalorder %s23, 0
        %s223 = scalar_select %p222, %s23, 0
        %s224 = smul.addr %s223, 8
        %s225 = scalar_lea.vmem %s2, %s224
        %p226 = scmp.lt.s32.totalorder %s23, 0
        %s227 = scalar_select %p226, %s23, 0
        %s228 = smul.addr %s227, 8
        %s229 = scalar_lea.vmem %s3, %s228
        %p231 = scmp.eq.s32.totalorder %s24, 0
        // Predicated region
        $region37: #{tpu_custom_call.1} parent=27 // pred_check
          %p232 = pneg %p231
        $region38: #{tpu_custom_call.1} parent=27 // pred_check_branch
          %234 = sbr.rel (%p232) target = $region40
        $region39: #{tpu_custom_call.1} parent=27 // pred_region
          %vm235 = vcmask 7168
          %236 = vst.msk [vmem:[#allocation3] sm:$0xff] %vm235, 0.0
          %237 = vst.msk [vmem:[#allocation4] sm:$0xff] %vm235, 0.0
        $region40: #{tpu_custom_call.1} parent=27 // pred_fallthru
          _
        %v238 = vld [vmem:[%s192] sm:$0xff]
        %v240 = vcombine.high %v238, %v238
        %242 = vst [vmem:[#allocation2] sm:$0xf] %v238
        %243 = vst [vmem:[#allocation2 + $0x8] sm:$0xf] %v240
        %v244 = vld [vmem:[%s192] sm:$0xff]
        %v245 = vld [vmem:[%s192 + $0x8] sm:$0xf]
        %v248 = vcombine.low %v244, %v244
        %v249 = vcombine.low %v245, %v245
        %250 = vrot.lane.b32.xlu0 %v248, 112
        %v251 = vpop.permute.xlu0 %250
        %252 = vrot.lane.b32.xlu0 %v244, 112
        %v253 = vpop.permute.xlu0 %252
        %254 = vrot.lane.b32.xlu0 %v249, 112
        %v255 = vpop.permute.xlu0 %254
        %vm256 = vcmask 916480
        %v257 = vsel %vm256, %v251, %v253
        %v258 = vsel %vm256, %v253, %v255
        %261 = vst [vmem:[#allocation2] sm:$0xf0] %v257
        %262 = vst [vmem:[#allocation2 + $0x8] sm:$0xf0] %v258
        %v263 = vld [vmem:[%s192] sm:$0xff]
        %v264 = vld [vmem:[%s192 + $0x8] sm:$0xf]
        %v267 = vcombine.high %v263, %v263
        %268 = vrot.lane.b32.xlu0 %v263, 96
        %v269 = vpop.permute.xlu0 %268
        %270 = vrot.lane.b32.xlu0 %v267, 96
        %v271 = vpop.permute.xlu0 %270
        %272 = vrot.lane.b32.xlu0 %v264, 96
        %v273 = vpop.permute.xlu0 %272
        %vm274 = vcmask 785408
        %v275 = vsel %vm274, %v269, %v271
        %v276 = vsel %vm274, %v271, %v273
        %279 = vst [vmem:[#allocation2 + $0x10] sm:$0xf] %v275
        %280 = vst [vmem:[#allocation2 + $0x18] sm:$0xf] %v276
        %v281 = vld [vmem:[%s192] sm:$0xff]
        %v282 = vld [vmem:[%s192 + $0x8] sm:$0xf]
        %v285 = vcombine.low %v281, %v281
        %v286 = vcombine.low %v282, %v282
        %287 = vrot.lane.b32.xlu0 %v285, 80
        %v288 = vpop.permute.xlu0 %287
        %289 = vrot.lane.b32.xlu0 %v281, 80
        %v290 = vpop.permute.xlu0 %289
        %291 = vrot.lane.b32.xlu0 %v286, 80
        %v292 = vpop.permute.xlu0 %291
        %vm293 = vcmask 654336
        %v294 = vsel %vm293, %v288, %v290
        %v295 = vsel %vm293, %v290, %v292
        %298 = vst [vmem:[#allocation2 + $0x10] sm:$0xf0] %v294
        %299 = vst [vmem:[#allocation2 + $0x18] sm:$0xf0] %v295
        %v300 = vld [vmem:[%s192] sm:$0xff]
        %v301 = vld [vmem:[%s192 + $0x8] sm:$0xf]
        %v304 = vcombine.high %v300, %v300
        %305 = vrot.lane.b32.xlu0 %v300, 64
        %v306 = vpop.permute.xlu0 %305
        %307 = vrot.lane.b32.xlu0 %v304, 64
        %v308 = vpop.permute.xlu0 %307
        %309 = vrot.lane.b32.xlu0 %v301, 64
        %v310 = vpop.permute.xlu0 %309
        %vm311 = vcmask 523264
        %v312 = vsel %vm311, %v306, %v308
        %v313 = vsel %vm311, %v308, %v310
        %316 = vst [vmem:[#allocation2 + $0x20] sm:$0xf] %v312
        %317 = vst [vmem:[#allocation2 + $0x28] sm:$0xf] %v313
        %v318 = vld [vmem:[%s192] sm:$0xff]
        %v319 = vld [vmem:[%s192 + $0x8] sm:$0xf]
        %v322 = vcombine.low %v318, %v318
        %v323 = vcombine.low %v319, %v319
        %324 = vrot.lane.b32.xlu0 %v322, 48
        %v325 = vpop.permute.xlu0 %324
        %326 = vrot.lane.b32.xlu0 %v318, 48
        %v327 = vpop.permute.xlu0 %326
        %328 = vrot.lane.b32.xlu0 %v323, 48
        %v329 = vpop.permute.xlu0 %328
        %vm330 = vcmask 392192
        %v331 = vsel %vm330, %v325, %v327
        %v332 = vsel %vm330, %v327, %v329
        %335 = vst [vmem:[#allocation2 + $0x20] sm:$0xf0] %v331
        %336 = vst [vmem:[#allocation2 + $0x28] sm:$0xf0] %v332
        %v337 = vld [vmem:[%s192] sm:$0xff]
        %v338 = vld [vmem:[%s192 + $0x8] sm:$0xf]
        %v341 = vcombine.high %v337, %v337
        %342 = vrot.lane.b32.xlu0 %v337, 32
        %v343 = vpop.permute.xlu0 %342
        %344 = vrot.lane.b32.xlu0 %v341, 32
        %v345 = vpop.permute.xlu0 %344
        %346 = vrot.lane.b32.xlu0 %v338, 32
        %v347 = vpop.permute.xlu0 %346
        %vm348 = vcmask 261120
        %v349 = vsel %vm348, %v343, %v345
        %v350 = vsel %vm348, %v345, %v347
        %353 = vst [vmem:[#allocation2 + $0x30] sm:$0xf] %v349
        %354 = vst [vmem:[#allocation2 + $0x38] sm:$0xf] %v350
        %v355 = vld [vmem:[%s192] sm:$0xff]
        %v356 = vld [vmem:[%s192 + $0x8] sm:$0xf]
        %v359 = vcombine.low %v355, %v355
        %v360 = vcombine.low %v356, %v356
        %361 = vrot.lane.b32.xlu0 %v359, 16
        %v362 = vpop.permute.xlu0 %361
        %363 = vrot.lane.b32.xlu0 %v355, 16
        %v364 = vpop.permute.xlu0 %363
        %365 = vrot.lane.b32.xlu0 %v360, 16
        %v366 = vpop.permute.xlu0 %365
        %vm367 = vcmask 130048
        %v368 = vsel %vm367, %v362, %v364
        %v369 = vsel %vm367, %v364, %v366
        %372 = vst [vmem:[#allocation2 + $0x30] sm:$0xf0] %v368
        %373 = vst [vmem:[#allocation2 + $0x38] sm:$0xf0] %v369
        %v374 = vld [vmem:[%s192 + $0x4] sm:$0xff]
        %v376 = vcombine.high %v374, %v374
        %378 = vst [vmem:[#allocation2 + $0x40] sm:$0xf] %v374
        %379 = vst [vmem:[#allocation2 + $0x48] sm:$0xf] %v376
        %v380 = vld [vmem:[#allocation7] sm:$0xff]
        %v381 = vpack.c.bf16 %v380, %v380
        %v382 = vld [vmem:[#allocation2] sm:$0xff]
        %v383 = vld [vmem:[#allocation2 + $0x8] sm:$0xff]
        %v384 = vld [vmem:[#allocation2 + $0x10] sm:$0xff]
        %v385 = vld [vmem:[#allocation2 + $0x18] sm:$0xff]
        %v386 = vld [vmem:[#allocation2 + $0x20] sm:$0xff]
        %v387 = vld [vmem:[#allocation2 + $0x28] sm:$0xff]
        %v388 = vld [vmem:[#allocation2 + $0x30] sm:$0xff]
        %v389 = vld [vmem:[#allocation2 + $0x38] sm:$0xff]
        %v390 = vld [vmem:[#allocation2 + $0x40] sm:$0xf]
        %v391 = vld [vmem:[#allocation2 + $0x48] sm:$0xf]
        %v392 = vpack.c.bf16 %v384, %v382
        %v393 = vpack.c.bf16 %v385, %v383
        %v394 = vpack.c.bf16 %v388, %v386
        %v395 = vpack.c.bf16 %v389, %v387
        %v396 = vpack.c.bf16 %v390, %v390
        %v397 = vpack.c.bf16 %v391, %v391
        %vm398 = vcmask 293888
        %v400 = vsel %vm398, %v381, 0
        %vm402 = vcmask 1041408
        %v404 = vsel %vm402, %v396, 0
        %v407 = vsel %vm402, %v397, 0
        %409 = vmatprep.subr.bf16.mxu0 %v393
        %410 = vmatpush1.bf16.msra.mxu0 %v392
        %411 = vmatprep.subr.bf16.mxu0 %v395
        %412 = vmatpush1.bf16.msra.mxu0 %v394
        %413 = vmatprep.subr.bf16.mxu0 %v407
        %414 = vmatpush1.bf16.msra.mxu0 %v404
        %415 = vmatprep.subr.bf16.mxu0 0
        %416 = vmatpush1.bf16.msra.mxu0 0
        %417 = vmatprep.subr.bf16.mxu0 0
        %418 = vmatpush1.bf16.msra.mxu0 0
        %419 = vmatprep.subr.bf16.mxu0 0
        %420 = vmatpush1.bf16.msra.mxu0 0
        %421 = vmatprep.subr.bf16.mxu0 0
        %422 = vmatpush1.bf16.msra.mxu0 0
        %423 = vmatprep.subr.bf16.mxu0 0
        %424 = vmatpush1.bf16.msra.mxu0 0
        %425 = vmatprep.subr.bf16.mxu0 0
        %426 = vmatpush1.bf16.msra.mxu0 0
        %427 = vmatprep.subr.bf16.mxu0 0
        %428 = vmatpush1.bf16.msra.mxu0 0
        %429 = vmatprep.subr.bf16.mxu0 0
        %430 = vmatpush1.bf16.msra.mxu0 0
        %431 = vmatprep.subr.bf16.mxu0 0
        %432 = vmatpush1.bf16.msra.mxu0 0
        %433 = vmatprep.subr.bf16.mxu0 0
        %434 = vmatpush1.bf16.msra.mxu0 0
        %435 = vmatprep.subr.bf16.mxu0 0
        %436 = vmatpush1.bf16.msra.mxu0 0
        %437 = vmatprep.subr.bf16.mxu0 0
        %438 = vmatpush1.bf16.msra.mxu0 0
        %439 = vmatprep.subr.bf16.mxu0 0
        %440 = vmatpush1.bf16.msra.mxu0 0
        %441 = vmatprep.mubr.bf16.mxu0 0
        %442 = vmatmul.mubr.bf16.gmra.mrb[0].mxu0 %v400
        %v443 = vpop.f32.mrb[0].mxu0
        %v444 = vadd.f32 0.0, %v443
        %v445 = vpop.f32.mrb[0].mxu0
        %v446 = vadd.f32 0.0, %v445
        %v447 = vpop.f32.mrb[0].mxu0
        %v448 = vpop.f32.mrb[0].mxu0
        %449 = vdwg.mxu0
        %v450 = vld [vmem:[#allocation3] sm:$0xff]
        %v451 = vadd.f32 %v444, %v446
        %452 = vadd.xlane.f32.xlu0 %v451
        %v453 = vpop.xlane.xlu0 %452
        %v454 = vadd.f32 %v450, %v453
        %vm455 = vcmask 7168
        %456 = vst.msk [vmem:[#allocation3] sm:$0xff] %vm455, %v454
        %v457 = vld [vmem:[#allocation4] sm:$0xff]
        %v458 = vmul.f32 %v444, %v444
        %v459 = vmul.f32 %v446, %v446
        %v460 = vadd.f32 %v458, %v459
        %461 = vadd.xlane.f32.xlu0 %v460
        %v462 = vpop.xlane.xlu0 %461
        %v463 = vadd.f32 %v457, %v462
        %464 = vst.msk [vmem:[#allocation4] sm:$0xff] %vm455, %v463
        %p465 = scmp.eq.s32.totalorder %s24, 1
        // Predicated region
        $region41: #{tpu_custom_call.1} parent=27 // pred_check
          %p466 = pneg %p465
        $region42: #{tpu_custom_call.1} parent=27 // pred_check_branch
          %468 = sbr.rel (%p466) target = $region44
        $region43: #{tpu_custom_call.1} parent=27 // pred_region
          %v469 = vld [vmem:[#allocation3] sm:$0xff]
          %470 = vst.msk [vmem:[%s225] sm:$0xff] %vm455, %v469
          %v471 = vld [vmem:[#allocation4] sm:$0xff]
          %472 = vst.msk [vmem:[%s229] sm:$0xff] %vm455, %v471
        $region44: #{tpu_custom_call.1} parent=27 // pred_fallthru
          _
        %p473 = scmp.lt.s32.totalorder %s23, 0
        %s474 = scalar_select %p473, %s23, 0
        %s475 = smul.addr %s474, 8
        %s476 = scalar_lea.vmem %s2, %s475
        %p477 = scmp.lt.s32.totalorder %s23, 0
        %s478 = scalar_select %p477, %s23, 0
        %s479 = smul.addr %s478, 8
        %s480 = scalar_lea.vmem %s3, %s479
        // Predicated region
        $region45: #{tpu_custom_call.1} parent=27 // pred_check
          %p481 = pneg %p101
        $region46: #{tpu_custom_call.1} parent=27 // pred_check_branch
          %483 = sbr.rel (%p481) target = $region48
        $region47: #{tpu_custom_call.1} parent=27 // pred_region
          _
        $region48: #{tpu_custom_call.1} parent=27 // pred_fallthru
          _
        // Predicated region
        $region49: #{tpu_custom_call.1} parent=27 // pred_check
          %p484 = pneg %p127
        $region50: #{tpu_custom_call.1} parent=27 // pred_check_branch
          %486 = sbr.rel (%p484) target = $region52
        $region51: #{tpu_custom_call.1} parent=27 // pred_region
          _
        $region52: #{tpu_custom_call.1} parent=27 // pred_fallthru
          _
        // Predicated region
        $region53: #{tpu_custom_call.1} parent=27 // pred_check
          %p487 = pneg %p101
        $region54: #{tpu_custom_call.1} parent=27 // pred_check_branch
          %489 = sbr.rel (%p487) target = $region56
        $region55: #{tpu_custom_call.1} parent=27 // pred_region
          %p490 = scmp.lt.s32.totalorder %s23, 0
          %s491 = scalar_select %p490, %s23, 0
          %s492 = smul.addr %s491, 8
          %s493 = scalar_lea.vmem %s2, %s492
        $region56: #{tpu_custom_call.1} parent=27 // pred_fallthru
          _
        // Predicated region
        $region57: #{tpu_custom_call.1} parent=27 // pred_check
          %p494 = pneg %p127
        $region58: #{tpu_custom_call.1} parent=27 // pred_check_branch
          %496 = sbr.rel (%p494) target = $region60
        $region59: #{tpu_custom_call.1} parent=27 // pred_region
          %p497 = scmp.lt.s32.totalorder %s23, 0
          %s498 = scalar_select %p497, %s23, 0
          %s499 = smul.addr %s498, 8
          %s500 = scalar_lea.vmem %s3, %s499
        $region60: #{tpu_custom_call.1} parent=27 // pred_fallthru
          _
      $region28: #{tpu_custom_call.1} parent=5 // pred_fallthru
        _
      %p501 = scmp.le.s32.totalorder 2, %s14
      // Predicated region
      $region61: #{tpu_custom_call.1} parent=5 // pred_check
        %p502 = pneg %p501
      $region62: #{tpu_custom_call.1} parent=5 // pred_check_branch
        %504 = sbr.rel (%p502) target = $region64
      $region63: #{tpu_custom_call.1} parent=5 // pred_region
        %s505 = ssub.s32 %s14, 2
      $region64: #{tpu_custom_call.1} parent=5 // pred_fallthru
        _
    $region6: #{tpu_custom_call.1} parent=1 // loop_footer
      %s18 = sadd.s32 1, %s14
    $region7: #{tpu_custom_call.1} parent=1 // loop_footer_branch
      %13 = sbr.rel target = $region3
    $region8: #{tpu_custom_call.1} parent=1 // loop_exit
      _
    %506 = vsyncpa [#allocation6], 1
    %s507 = scalar_lea.sflag [#allocation6], 1
    %508 = vsyncpa %s507, 1
    %509 = vsyncpa [#allocation8], 1

</llo_original>
